<compile_context>
chip_gen: v7x
topology: tpu7x:2x2x1
jax: 0.10.0
libtpu: 0.0.40
codegen_flags: <defaults>
</compile_context>

<pallas_src>
from functools import partial

import jax
import jax.numpy as jnp
from jax.experimental import pallas as pl
from jax.experimental.pallas import tpu as pltpu


# ----------------------------------------------------------------------------
# Fused kernel: (conv3x3 + bias + ReLU) x 2, one batch BLOCK per grid step.
# ----------------------------------------------------------------------------
def _fused_conv_block_kernel(x_ref, wb1_ref, b1_ref, wb2_ref, b2_ref, out_ref,
                             lhs1_ref, lhs2_ref, *, B_blk, H, WCin, WCout):
    # x_ref:    (B_blk, H, WCin)      lane-dense input block (f32)
    # wb1_ref:  (3*WCin,  WCout)      dy-folded banded layer-1 weights (bf16)
    # b1_ref:   (1, WCout)            bias tiled across width (f32)
    # wb2_ref:  (3*WCout, WCout)      dy-folded banded layer-2 weights (bf16)
    # b2_ref:   (1, WCout)
    # out_ref:  (B_blk, H, WCout)     lane-dense output block (f32)
    # lhs1_ref: VMEM (B_blk*H, 3*WCin)  K-folded LHS slab, layer 1 (bf16)
    # lhs2_ref: VMEM (B_blk*H, 3*WCout) K-folded LHS slab, layer 2 (bf16)

    zin = jnp.zeros((1, WCin), jnp.bfloat16)
    zout = jnp.zeros((1, WCout), jnp.bfloat16)

    # ---------------- layer 1: build K-folded LHS, one dot, ReLU -------------
    # Output row (b, y), band dy uses input row y + dy - 1 (zero outside).
    for b in range(B_blk):                               # static unroll
        r = b * H
        xb = x_ref[b].astype(jnp.bfloat16)               # (H, WCin)
        # dy = 1 : center rows
        lhs1_ref[r:r + H, WCin:2 * WCin] = xb
        # dy = 0 : input row y-1 ; top output row sees zero padding
        lhs1_ref[r:r + 1, 0:WCin] = zin
        lhs1_ref[r + 1:r + H, 0:WCin] = xb[0:H - 1, :]
        # dy = 2 : input row y+1 ; bottom output row sees zero padding
        lhs1_ref[r:r + H - 1, 2 * WCin:3 * WCin] = xb[1:H, :]
        lhs1_ref[r + H - 1:r + H, 2 * WCin:3 * WCin] = zin

    acc1 = jnp.dot(lhs1_ref[...], wb1_ref[...],
                   preferred_element_type=jnp.float32)   # (B_blk*H, WCout) f32
    acc1 = acc1 + b1_ref[...]                            # bias broadcast (f32)
    a1 = jnp.maximum(acc1, 0.0).astype(jnp.bfloat16)     # layer-1 activation

    # ---------------- layer 2: same structure on the activation --------------
    for b in range(B_blk):
        r = b * H
        ab = a1[r:r + H, :]                              # (H, WCout) bf16
        lhs2_ref[r:r + H, WCout:2 * WCout] = ab
        lhs2_ref[r:r + 1, 0:WCout] = zout
        lhs2_ref[r + 1:r + H, 0:WCout] = ab[0:H - 1, :]
        lhs2_ref[r:r + H - 1, 2 * WCout:3 * WCout] = ab[1:H, :]
        lhs2_ref[r + H - 1:r + H, 2 * WCout:3 * WCout] = zout

    acc2 = jnp.dot(lhs2_ref[...], wb2_ref[...],
                   preferred_element_type=jnp.float32)
    acc2 = acc2 + b2_ref[...]
    y = jnp.maximum(acc2, 0.0)                           # (B_blk*H, WCout) f32

    for b in range(B_blk):
        out_ref[b] = y[b * H:(b + 1) * H, :]             # full-lane stores


# ----------------------------------------------------------------------------
# Parameter preprocessing (run ONCE per parameter set, NOT per forward).
# ----------------------------------------------------------------------------
def _band_from_taps(w_taps, W):
    """(3, 3, Cin, Cout) taps -> (3*W*Cin, W*Cout) dy-folded banded matrix.

    band[dy*W*Cin + p*Cin + ci, x*Cout + co] = w[dy, p-x+1, ci, co]
    when 0 <= p-x+1 < 3, else 0.  Width ("same") padding is folded into the
    band structure; height padding is handled in-kernel.
    """
    _, _, Cin, Cout = w_taps.shape
    p = jnp.arange(W)[None, :, None]                     # input column
    x = jnp.arange(W)[None, None, :]                     # output column
    d = jnp.arange(3)[:, None, None]                     # tap dx
    sel = (p - x + 1 == d).astype(w_taps.dtype)          # (3, W, W)
    band = jnp.einsum('dpx,edio->epixo', sel, w_taps)    # (3, W, Cin, W, Cout)
    return band.reshape(3 * W * Cin, W * Cout)


def prepare_conv_block_params(params, W):
    """PyTorch Conv2d params -> kernel-ready banded bf16 weights + f32 biases."""
    w1_taps = jnp.transpose(params["w1_t"], (2, 3, 1, 0))   # (3,3,Cin,Cout)
    w2_taps = jnp.transpose(params["w2_t"], (2, 3, 1, 0))   # (3,3,Cout,Cout)
    return {
        "wb1": _band_from_taps(w1_taps, W).astype(jnp.bfloat16),
        "wb2": _band_from_taps(w2_taps, W).astype(jnp.bfloat16),
        "b1": jnp.tile(params["b1"], W)[None, :].astype(jnp.float32),
        "b2": jnp.tile(params["b2"], W)[None, :].astype(jnp.float32),
    }


def init_conv_block_params(key, in_ch, out_ch):
    """Deterministic synthetic params, PyTorch Conv2d weight layout (O,I,3,3)."""
    k1, k2, k3, k4 = jax.random.split(key, 4)
    w1_t = jax.random.normal(k1, (out_ch, in_ch, 3, 3), jnp.float32) * 0.1
    b1 = jax.random.normal(k2, (out_ch,), jnp.float32) * 0.1
    w2_t = jax.random.normal(k3, (out_ch, out_ch, 3, 3), jnp.float32) * 0.1
    b2 = jax.random.normal(k4, (out_ch,), jnp.float32) * 0.1
    return {"w1_t": w1_t, "b1": b1, "w2_t": w2_t, "b2": b2}


# ----------------------------------------------------------------------------
# Forward wrappers.
# ----------------------------------------------------------------------------
def _choose_batch_block(N, H):
    """B_blk so B_blk*H ~ 256 MXU rows, >=2 grid steps when N>=2, dividing N."""
    target_rows = 256                      # v6e/v7x MXU depth; fine on v5e too
    b = max(1, min(N, target_rows // max(1, H)))
    if N >= 2:
        b = min(b, max(1, N // 2))         # keep both v7x TensorCores busy
    while N % b:
        b -= 1
    return b


def _conv_block_lane(x_lane, wb1, b1, wb2, b2):
    """Fast path: lane-dense NHWC-flat input (N, H, W*Cin) -> (N, H, W*Cout)."""
    N, H, WCin = x_lane.shape
    WCout = b1.shape[1]
    if WCout % 128 != 0:
        raise ValueError(f"W*Cout must be a multiple of 128 for lane-dense "
                         f"full-lane stores, got {WCout}")
    if wb1.shape != (3 * WCin, WCout) or wb2.shape != (3 * WCout, WCout):
        raise ValueError("banded weight shapes inconsistent with input")
    if H < 2:
        raise ValueError("H must be >= 2")

    B_blk = _choose_batch_block(N, H)
    grid = (N // B_blk,)

    return pl.pallas_call(
        partial(_fused_conv_block_kernel,
                B_blk=B_blk, H=H, WCin=WCin, WCout=WCout),
        out_shape=jax.ShapeDtypeStruct((N, H, WCout), jnp.float32),
        grid=grid,
        in_specs=[
            pl.BlockSpec((B_blk, H, WCin), lambda n: (n, 0, 0)),
            pl.BlockSpec((3 * WCin, WCout), lambda n: (0, 0)),
            pl.BlockSpec((1, WCout), lambda n: (0, 0)),
            pl.BlockSpec((3 * WCout, WCout), lambda n: (0, 0)),
            pl.BlockSpec((1, WCout), lambda n: (0, 0)),
        ],
        out_specs=pl.BlockSpec((B_blk, H, WCout), lambda n: (n, 0, 0)),
        scratch_shapes=[
            pltpu.VMEM((B_blk * H, 3 * WCin), jnp.bfloat16),   # layer-1 LHS
            pltpu.VMEM((B_blk * H, 3 * WCout), jnp.bfloat16),  # layer-2 LHS
        ],
        compiler_params=pltpu.CompilerParams(
            dimension_semantics=("parallel",)),
    )(x_lane, wb1, b1, wb2, b2)


conv_block_lane = jax.jit(_conv_block_lane)


@jax.jit
def conv_block_forward(x_nchw, prepared):
    """PyTorch-parity entry: NCHW f32 in, NCHW f32 out.

    The layout transposes here exist only to match nn.Conv2d semantics for the
    self-check; real producers/consumers should use conv_block_lane directly.
    """
    N, Cin, H, W = x_nchw.shape
    WCout = prepared["b1"].shape[1]
    Cout = WCout // W
    x_lane = jnp.transpose(x_nchw, (0, 2, 3, 1)).reshape(N, H, W * Cin)
    out = _conv_block_lane(x_lane, prepared["wb1"], prepared["b1"],
                           prepared["wb2"], prepared["b2"])
    out = out.reshape(N, H, W, Cout)
    return jnp.transpose(out, (0, 3, 1, 2))


# ----------------------------------------------------------------------------
# Pure-JAX references (for verification only).
# ----------------------------------------------------------------------------
def _reference_conv_block(x_nchw, params):
    """f32 reference matching torch semantics exactly."""
    def conv(x, w_t, b):
        y = jax.lax.conv_general_dilated(
            x, w_t, window_strides=(1, 1), padding="SAME",
            dimension_numbers=("NCHW", "OIHW", "NCHW"))
        return jnp.maximum(y + b[None, :, None, None], 0.0)
    y = conv(x_nchw, params["w1_t"], params["b1"])
    return conv(y, params["w2_t"], params["b2"])


def _reference_conv_block_bf16(x_nchw, params):
    """Reference that mirrors the kernel's numerics: bf16 MXU operands,
    f32 accumulation / bias / ReLU."""
    def q(v):
        return v.astype(jnp.bfloat16).astype(jnp.float32)
    def conv(x, w_t, b):
        y = jax.lax.conv_general_dilated(
            q(x), q(w_t), window_strides=(1, 1), padding="SAME",
            dimension_numbers=("NCHW", "OIHW", "NCHW"),
            preferred_element_type=jnp.float32)
        return jnp.maximum(y + b[None, :, None, None], 0.0)
    y = conv(x_nchw, params["w1_t"], params["b1"])
    return conv(y, params["w2_t"], params["b2"])


if __name__ == "__main__":
    key = jax.random.PRNGKey(0)
    k_x, k_p = jax.random.split(key)

    N, in_ch, out_ch, H, W = 2, 4, 8, 16, 16
    x = jax.random.normal(k_x, (N, in_ch, H, W), jnp.float32)
    params = init_conv_block_params(k_p, in_ch, out_ch)

    # One-time weight preprocessing (hoisted out of the forward pass).
    prepared = jax.tree_util.tree_map(jax.block_until_ready,
                                      prepare_conv_block_params(params, W))

    out = conv_block_forward(x, prepared)
    out = jax.block_until_ready(out)
    assert out.shape == (N, out_ch, H, W)

    # Tight check vs a reference with matched bf16-operand / f32-accum numerics.
    ref_bf16 = _reference_conv_block_bf16(x, params)
    assert jnp.allclose(out, ref_bf16, atol=5e-3, rtol=5e-3), \
        "mismatch vs bf16-matched reference"

    # Sanity check vs the pure-f32 PyTorch-semantics reference (bf16 MXU
    # operands introduce ~0.4% relative error, hence the looser tolerance).
    ref_f32 = _reference_conv_block(x, params)
    assert jnp.allclose(out, ref_f32, atol=5e-2, rtol=5e-2), \
        "mismatch vs f32 reference"

    print("KERNEL_OK")
</pallas_src>

<mosaic_0001>
module attributes {stable_mosaic.version = 11 : i64} {
  func.func @_fused_conv_block_kernel(%arg0: i32, %arg1: memref<1x16x64xf32, #tpu.memory_space<vmem>>, %arg2: memref<192x128xbf16, #tpu.memory_space<vmem>>, %arg3: memref<1x128xf32, #tpu.memory_space<vmem>>, %arg4: memref<384x128xbf16, #tpu.memory_space<vmem>>, %arg5: memref<1x128xf32, #tpu.memory_space<vmem>>, %arg6: memref<1x16x128xf32, #tpu.memory_space<vmem>>, %arg7: memref<16x192xbf16, #tpu.memory_space<vmem>>, %arg8: memref<16x384xbf16, #tpu.memory_space<vmem>>) attributes {dimension_semantics = [#tpu.dimension_semantics<parallel>], iteration_bounds = array<i64: 2>, scalar_prefetch = 0 : i64, scratch_operands = 2 : i64, tpu.core_type = #tpu.core_type<tc>, window_params = [{transform_indices = @transform_0, window_bounds = array<i64: 1, 16, 64>}, {pipeline_mode = #tpu.pipeline_mode<synchronous>, transform_indices = @transform_1, window_bounds = array<i64: 192, 128>}, {pipeline_mode = #tpu.pipeline_mode<synchronous>, transform_indices = @transform_2, window_bounds = array<i64: 1, 128>}, {pipeline_mode = #tpu.pipeline_mode<synchronous>, transform_indices = @transform_3, window_bounds = array<i64: 384, 128>}, {pipeline_mode = #tpu.pipeline_mode<synchronous>, transform_indices = @transform_4, window_bounds = array<i64: 1, 128>}, {transform_indices = @transform_5, window_bounds = array<i64: 1, 16, 128>}]} {
    %cst = arith.constant 0.000000e+00 : bf16
    %0 = vector.broadcast %cst : bf16 to vector<1x64xbf16>
    %cst_0 = arith.constant 0.000000e+00 : bf16
    %1 = vector.broadcast %cst_0 : bf16 to vector<1x128xbf16>
    %c0 = arith.constant 0 : index
    %c0_1 = arith.constant 0 : index
    %c0_2 = arith.constant 0 : index
    %2 = vector.load %arg1[%c0, %c0_1, %c0_2] : memref<1x16x64xf32, #tpu.memory_space<vmem>>, vector<1x16x64xf32>
    %3 = vector.shape_cast %2 : vector<1x16x64xf32> to vector<16x64xf32>
    %4 = arith.truncf %3 : vector<16x64xf32> to vector<16x64xbf16>
    %c0_3 = arith.constant 0 : index
    %c64 = arith.constant 64 : index
    %5 = vector.load %arg7[%c0_3, %c64] : memref<16x192xbf16, #tpu.memory_space<vmem>>, vector<16x64xbf16>
    tpu.vector_store %arg7[%c0_3, %c64], %4 {strides = array<i32>} : memref<16x192xbf16, #tpu.memory_space<vmem>>, vector<16x64xbf16>,
    %c0_4 = arith.constant 0 : index
    %c0_5 = arith.constant 0 : index
    %6 = vector.load %arg7[%c0_4, %c0_5] : memref<16x192xbf16, #tpu.memory_space<vmem>>, vector<1x64xbf16>
    tpu.vector_store %arg7[%c0_4, %c0_5], %0 {strides = array<i32>} : memref<16x192xbf16, #tpu.memory_space<vmem>>, vector<1x64xbf16>,
    %7 = vector.extract_strided_slice %4 {offsets = [0, 0], sizes = [15, 64], strides = [1, 1]} : vector<16x64xbf16> to vector<15x64xbf16>
    %c1 = arith.constant 1 : index
    %c0_6 = arith.constant 0 : index
    %8 = vector.load %arg7[%c1, %c0_6] : memref<16x192xbf16, #tpu.memory_space<vmem>>, vector<15x64xbf16>
    tpu.vector_store %arg7[%c1, %c0_6], %7 {strides = array<i32>} : memref<16x192xbf16, #tpu.memory_space<vmem>>, vector<15x64xbf16>,
    %9 = vector.extract_strided_slice %4 {offsets = [1, 0], sizes = [15, 64], strides = [1, 1]} : vector<16x64xbf16> to vector<15x64xbf16>
    %c0_7 = arith.constant 0 : index
    %c128 = arith.constant 128 : index
    %10 = vector.load %arg7[%c0_7, %c128] : memref<16x192xbf16, #tpu.memory_space<vmem>>, vector<15x64xbf16>
    tpu.vector_store %arg7[%c0_7, %c128], %9 {strides = array<i32>} : memref<16x192xbf16, #tpu.memory_space<vmem>>, vector<15x64xbf16>,
    %c15 = arith.constant 15 : index
    %c128_8 = arith.constant 128 : index
    %11 = vector.load %arg7[%c15, %c128_8] : memref<16x192xbf16, #tpu.memory_space<vmem>>, vector<1x64xbf16>
    tpu.vector_store %arg7[%c15, %c128_8], %0 {strides = array<i32>} : memref<16x192xbf16, #tpu.memory_space<vmem>>, vector<1x64xbf16>,
    %c0_9 = arith.constant 0 : index
    %c0_10 = arith.constant 0 : index
    %12 = vector.load %arg7[%c0_9, %c0_10] : memref<16x192xbf16, #tpu.memory_space<vmem>>, vector<16x192xbf16>
    %c0_11 = arith.constant 0 : index
    %c0_12 = arith.constant 0 : index
    %13 = vector.load %arg2[%c0_11, %c0_12] : memref<192x128xbf16, #tpu.memory_space<vmem>>, vector<192x128xbf16>
    %cst_13 = arith.constant dense<0.000000e+00> : vector<16x128xf32>
    %14 = tpu.matmul %12, %13, %cst_13 {dimension_numbers = #tpu.dot_dimension_numbers<[1], [0], [0], [1], [0, 0, 1, 1], [], []>} : vector<16x192xbf16>, vector<192x128xbf16>, vector<16x128xf32> -> vector<16x128xf32>
    %c0_14 = arith.constant 0 : index
    %c0_15 = arith.constant 0 : index
    %15 = vector.load %arg3[%c0_14, %c0_15] : memref<1x128xf32, #tpu.memory_space<vmem>>, vector<1x128xf32>
    %16 = vector.broadcast %15 : vector<1x128xf32> to vector<16x128xf32>
    %17 = arith.addf %14, %16 : vector<16x128xf32>
    %cst_16 = arith.constant 0.000000e+00 : f32
    %18 = vector.broadcast %cst_16 : f32 to vector<16x128xf32>
    %19 = arith.maximumf %17, %18 : vector<16x128xf32>
    %20 = arith.truncf %19 : vector<16x128xf32> to vector<16x128xbf16>
    %c0_17 = arith.constant 0 : index
    %c128_18 = arith.constant 128 : index
    %21 = vector.load %arg8[%c0_17, %c128_18] : memref<16x384xbf16, #tpu.memory_space<vmem>>, vector<16x128xbf16>
    tpu.vector_store %arg8[%c0_17, %c128_18], %20 {strides = array<i32>} : memref<16x384xbf16, #tpu.memory_space<vmem>>, vector<16x128xbf16>,
    %c0_19 = arith.constant 0 : index
    %c0_20 = arith.constant 0 : index
    %22 = vector.load %arg8[%c0_19, %c0_20] : memref<16x384xbf16, #tpu.memory_space<vmem>>, vector<1x128xbf16>
    tpu.vector_store %arg8[%c0_19, %c0_20], %1 {strides = array<i32>} : memref<16x384xbf16, #tpu.memory_space<vmem>>, vector<1x128xbf16>,
    %23 = vector.extract_strided_slice %20 {offsets = [0, 0], sizes = [15, 128], strides = [1, 1]} : vector<16x128xbf16> to vector<15x128xbf16>
    %c1_21 = arith.constant 1 : index
    %c0_22 = arith.constant 0 : index
    %24 = vector.load %arg8[%c1_21, %c0_22] : memref<16x384xbf16, #tpu.memory_space<vmem>>, vector<15x128xbf16>
    tpu.vector_store %arg8[%c1_21, %c0_22], %23 {strides = array<i32>} : memref<16x384xbf16, #tpu.memory_space<vmem>>, vector<15x128xbf16>,
    %25 = vector.extract_strided_slice %20 {offsets = [1, 0], sizes = [15, 128], strides = [1, 1]} : vector<16x128xbf16> to vector<15x128xbf16>
    %c0_23 = arith.constant 0 : index
    %c256 = arith.constant 256 : index
    %26 = vector.load %arg8[%c0_23, %c256] : memref<16x384xbf16, #tpu.memory_space<vmem>>, vector<15x128xbf16>
    tpu.vector_store %arg8[%c0_23, %c256], %25 {strides = array<i32>} : memref<16x384xbf16, #tpu.memory_space<vmem>>, vector<15x128xbf16>,
    %c15_24 = arith.constant 15 : index
    %c256_25 = arith.constant 256 : index
    %27 = vector.load %arg8[%c15_24, %c256_25] : memref<16x384xbf16, #tpu.memory_space<vmem>>, vector<1x128xbf16>
    tpu.vector_store %arg8[%c15_24, %c256_25], %1 {strides = array<i32>} : memref<16x384xbf16, #tpu.memory_space<vmem>>, vector<1x128xbf16>,
    %c0_26 = arith.constant 0 : index
    %c0_27 = arith.constant 0 : index
    %28 = vector.load %arg8[%c0_26, %c0_27] : memref<16x384xbf16, #tpu.memory_space<vmem>>, vector<16x384xbf16>
    %c0_28 = arith.constant 0 : index
    %c0_29 = arith.constant 0 : index
    %29 = vector.load %arg4[%c0_28, %c0_29] : memref<384x128xbf16, #tpu.memory_space<vmem>>, vector<384x128xbf16>
    %cst_30 = arith.constant dense<0.000000e+00> : vector<16x128xf32>
    %30 = tpu.matmul %28, %29, %cst_30 {dimension_numbers = #tpu.dot_dimension_numbers<[1], [0], [0], [1], [0, 0, 1, 1], [], []>} : vector<16x384xbf16>, vector<384x128xbf16>, vector<16x128xf32> -> vector<16x128xf32>
    %c0_31 = arith.constant 0 : index
    %c0_32 = arith.constant 0 : index
    %31 = vector.load %arg5[%c0_31, %c0_32] : memref<1x128xf32, #tpu.memory_space<vmem>>, vector<1x128xf32>
    %32 = vector.broadcast %31 : vector<1x128xf32> to vector<16x128xf32>
    %33 = arith.addf %30, %32 : vector<16x128xf32>
    %cst_33 = arith.constant 0.000000e+00 : f32
    %34 = vector.broadcast %cst_33 : f32 to vector<16x128xf32>
    %35 = arith.maximumf %33, %34 : vector<16x128xf32>
    %c0_34 = arith.constant 0 : index
    %c0_35 = arith.constant 0 : index
    %c0_36 = arith.constant 0 : index
    %36 = vector.load %arg6[%c0_34, %c0_35, %c0_36] : memref<1x16x128xf32, #tpu.memory_space<vmem>>, vector<1x16x128xf32>
    %37 = vector.shape_cast %36 : vector<1x16x128xf32> to vector<16x128xf32>
    %38 = vector.shape_cast %35 : vector<16x128xf32> to vector<1x16x128xf32>
    tpu.vector_store %arg6[%c0_34, %c0_35, %c0_36], %38 {strides = array<i32>} : memref<1x16x128xf32, #tpu.memory_space<vmem>>, vector<1x16x128xf32>,
    return
  }
  func.func @transform_0(%arg0: i32) -> (i32, i32, i32) {
    %c0_i32 = arith.constant 0 : i32
    %c0_i32_0 = arith.constant 0 : i32
    %c0_i32_1 = arith.constant 0 : i32
    return %arg0, %c0_i32, %c0_i32_0 : i32, i32, i32
  }
  func.func @transform_1(%arg0: i32) -> (i32, i32) {
    %c0_i32 = arith.constant 0 : i32
    %c0_i32_0 = arith.constant 0 : i32
    %c0_i32_1 = arith.constant 0 : i32
    return %c0_i32, %c0_i32_0 : i32, i32
  }
  func.func @transform_2(%arg0: i32) -> (i32, i32) {
    %c0_i32 = arith.constant 0 : i32
    %c0_i32_0 = arith.constant 0 : i32
    %c0_i32_1 = arith.constant 0 : i32
    return %c0_i32, %c0_i32_0 : i32, i32
  }
  func.func @transform_3(%arg0: i32) -> (i32, i32) {
    %c0_i32 = arith.constant 0 : i32
    %c0_i32_0 = arith.constant 0 : i32
    %c0_i32_1 = arith.constant 0 : i32
    return %c0_i32, %c0_i32_0 : i32, i32
  }
  func.func @transform_4(%arg0: i32) -> (i32, i32) {
    %c0_i32 = arith.constant 0 : i32
    %c0_i32_0 = arith.constant 0 : i32
    %c0_i32_1 = arith.constant 0 : i32
    return %c0_i32, %c0_i32_0 : i32, i32
  }
  func.func @transform_5(%arg0: i32) -> (i32, i32, i32) {
    %c0_i32 = arith.constant 0 : i32
    %c0_i32_0 = arith.constant 0 : i32
    %c0_i32_1 = arith.constant 0 : i32
    return %arg0, %c0_i32, %c0_i32_0 : i32, i32, i32
  }
}

</mosaic_0001>

<llo_original>
// kernel: conv_block_forward.1
$region0: #{conv_block_forward.1}
  #allocation0 [shape = 'u32[]', space=smem, size = 0x4, offset = 0x4, fixed_abs, tag = 'smem constant byte address 0x4 - core index']
  #allocation1 [shape = 'u32[144,128]{1,0:T(1,128)}', space=vmem, size = 0x12000, scoped, tag = 'internal scratch']
  #allocation2 [shape = 'bf16[16,192]{1,0:T(16,128)(2,1)}', space=vmem, size = 0x2000, scoped, tag = 'scratch operand']
  #allocation3 [shape = 'bf16[16,384]{1,0:T(16,128)(2,1)}', space=vmem, size = 0x3000, scoped, tag = 'scratch operand']
  %s0 = inlined_call_operand.vmem [shape: f32[2,16,64], index: 0, kind: input, shape index: {}]
  %s1 = inlined_call_operand.vmem [shape: bf16[192,128], index: 1, kind: input, shape index: {}]
  %s2 = inlined_call_operand.vmem [shape: f32[1,128], index: 2, kind: input, shape index: {}]
  %s3 = inlined_call_operand.vmem [shape: bf16[384,128], index: 3, kind: input, shape index: {}]
  %s4 = inlined_call_operand.vmem [shape: f32[1,128], index: 4, kind: input, shape index: {}]
  %s5 = inlined_call_operand.vmem [shape: f32[2,16,128], index: 5, kind: output, shape index: {}]
  %s6 = sld [smem:[#allocation0]]
  $region53: #{conv_block_forward.1} parent=0
    _
  %s8 = ssub.s32 1, %s6
  %s9 = scalar_select 0, %s8, %s6
  loop: start=0, step=1, limit=4
  $region2: #{conv_block_forward.1} parent=0 // loop_pre_header
    _
  $region3: #{conv_block_forward.1} parent=0 // loop_header
    %s11 = sphi 0, %s15
    %p12 = scmp.ge.s32.totalorder %s11, 4
    %s21 = sphi 0, %s23
    %s24 = sphi 0, %s21
    %s25 = sphi 0, %s24
    %s41 = sphi 0, %s25
    %s45 = sphi 0, %s45
    %s47 = sphi 0, %s45
    %s48 = sphi 0, %s47
    %s62 = sphi 0, %s48
    %s66 = sphi 0, %s66
    %s68 = sphi 0, %s66
    %s69 = sphi 0, %s68
    %s83 = sphi 0, %s69
    %s87 = sphi 0, %s87
    %s89 = sphi 0, %s87
    %s90 = sphi 0, %s89
    %s104 = sphi 0, %s90
    %s108 = sphi 0, %s108
    %s110 = sphi 0, %s108
    %s111 = sphi 0, %s110
    %s125 = sphi 0, %s111
    %s131 = sphi 0, %s133
    %s134 = sphi 0, %s131
    %s135 = sphi 0, %s134
    %s151 = sphi 0, %s135
  $region4: #{conv_block_forward.1} parent=0 // loop_header_branch
    %14 = sbr.rel (%p12) target = $region8
  $region5: #{conv_block_forward.1} parent=0 // loop_body
    %s16 = ssub.s32 %s11, 1
    %s17 = ssub.s32 %s11, 2
    %s18 = sadd.s32 %s11, 1
    %s19 = ssub.s32 %s11, %s18
    %p20 = scmp.eq.s32.totalorder %s19, 0
    %s22 = sadd.s32 %s21, 1
    %s23 = scalar_select %p20, %s21, %s22
    %p26 = pneg %p20
    %p27 = scmp.eq.s32.totalorder %s11, 1
    %p28 = por %p26, %p27
    %p29 = scmp.ne.s32.totalorder %s21, %s24
    %p30 = scmp.eq.s32.totalorder %s11, 0
    %p31 = por %p29, %p30
    %p32 = scmp.ne.s32.totalorder %s21, %s24
    %p33 = scmp.eq.s32.totalorder %s16, 1
    %p34 = por %p32, %p33
    %p35 = scmp.ne.s32.totalorder %s24, %s25
    %p36 = scmp.eq.s32.totalorder %s16, 0
    %p37 = por %p35, %p36
    %p38 = scmp.ne.s32.totalorder %s24, %s25
    %p39 = scmp.eq.s32.totalorder %s17, 1
    %p40 = por %p38, %p39
    %p42 = scmp.ne.s32.totalorder %s25, %s41
    %p43 = scmp.eq.s32.totalorder %s17, 0
    %p44 = por %p42, %p43
    %s46 = sadd.s32 %s45, 1
    %p49 = scmp.eq.s32.totalorder %s11, 1
    %p50 = scmp.ne.s32.totalorder %s45, %s47
    %p51 = scmp.eq.s32.totalorder %s11, 0
    %p52 = por %p50, %p51
    %p53 = scmp.ne.s32.totalorder %s45, %s47
    %p54 = scmp.eq.s32.totalorder %s16, 1
    %p55 = por %p53, %p54
    %p56 = scmp.ne.s32.totalorder %s47, %s48
    %p57 = scmp.eq.s32.totalorder %s16, 0
    %p58 = por %p56, %p57
    %p59 = scmp.ne.s32.totalorder %s47, %s48
    %p60 = scmp.eq.s32.totalorder %s17, 1
    %p61 = por %p59, %p60
    %p63 = scmp.ne.s32.totalorder %s48, %s62
    %p64 = scmp.eq.s32.totalorder %s17, 0
    %p65 = por %p63, %p64
    %s67 = sadd.s32 %s66, 1
    %p70 = scmp.eq.s32.totalorder %s11, 1
    %p71 = scmp.ne.s32.totalorder %s66, %s68
    %p72 = scmp.eq.s32.totalorder %s11, 0
    %p73 = por %p71, %p72
    %p74 = scmp.ne.s32.totalorder %s66, %s68
    %p75 = scmp.eq.s32.totalorder %s16, 1
    %p76 = por %p74, %p75
    %p77 = scmp.ne.s32.totalorder %s68, %s69
    %p78 = scmp.eq.s32.totalorder %s16, 0
    %p79 = por %p77, %p78
    %p80 = scmp.ne.s32.totalorder %s68, %s69
    %p81 = scmp.eq.s32.totalorder %s17, 1
    %p82 = por %p80, %p81
    %p84 = scmp.ne.s32.totalorder %s69, %s83
    %p85 = scmp.eq.s32.totalorder %s17, 0
    %p86 = por %p84, %p85
    %s88 = sadd.s32 %s87, 1
    %p91 = scmp.eq.s32.totalorder %s11, 1
    %p92 = scmp.ne.s32.totalorder %s87, %s89
    %p93 = scmp.eq.s32.totalorder %s11, 0
    %p94 = por %p92, %p93
    %p95 = scmp.ne.s32.totalorder %s87, %s89
    %p96 = scmp.eq.s32.totalorder %s16, 1
    %p97 = por %p95, %p96
    %p98 = scmp.ne.s32.totalorder %s89, %s90
    %p99 = scmp.eq.s32.totalorder %s16, 0
    %p100 = por %p98, %p99
    %p101 = scmp.ne.s32.totalorder %s89, %s90
    %p102 = scmp.eq.s32.totalorder %s17, 1
    %p103 = por %p101, %p102
    %p105 = scmp.ne.s32.totalorder %s90, %s104
    %p106 = scmp.eq.s32.totalorder %s17, 0
    %p107 = por %p105, %p106
    %s109 = sadd.s32 %s108, 1
    %p112 = scmp.eq.s32.totalorder %s11, 1
    %p113 = scmp.ne.s32.totalorder %s108, %s110
    %p114 = scmp.eq.s32.totalorder %s11, 0
    %p115 = por %p113, %p114
    %p116 = scmp.ne.s32.totalorder %s108, %s110
    %p117 = scmp.eq.s32.totalorder %s16, 1
    %p118 = por %p116, %p117
    %p119 = scmp.ne.s32.totalorder %s110, %s111
    %p120 = scmp.eq.s32.totalorder %s16, 0
    %p121 = por %p119, %p120
    %p122 = scmp.ne.s32.totalorder %s110, %s111
    %p123 = scmp.eq.s32.totalorder %s17, 1
    %p124 = por %p122, %p123
    %p126 = scmp.ne.s32.totalorder %s111, %s125
    %p127 = scmp.eq.s32.totalorder %s17, 0
    %p128 = por %p126, %p127
    %s129 = ssub.s32 %s11, %s18
    %p130 = scmp.eq.s32.totalorder %s129, 0
    %s132 = sadd.s32 %s131, 1
    %s133 = scalar_select %p130, %s131, %s132
    %p136 = pneg %p130
    %p137 = scmp.eq.s32.totalorder %s11, 1
    %p138 = por %p136, %p137
    %p139 = scmp.ne.s32.totalorder %s131, %s134
    %p140 = scmp.eq.s32.totalorder %s11, 0
    %p141 = por %p139, %p140
    %p142 = scmp.ne.s32.totalorder %s131, %s134
    %p143 = scmp.eq.s32.totalorder %s16, 1
    %p144 = por %p142, %p143
    %p145 = scmp.ne.s32.totalorder %s134, %s135
    %p146 = scmp.eq.s32.totalorder %s16, 0
    %p147 = por %p145, %p146
    %p148 = scmp.ne.s32.totalorder %s134, %s135
    %p149 = scmp.eq.s32.totalorder %s17, 1
    %p150 = por %p148, %p149
    %p152 = scmp.ne.s32.totalorder %s135, %s151
    %p153 = scmp.eq.s32.totalorder %s17, 0
    %p154 = por %p152, %p153
    %p155 = scmp.le.s32.totalorder 1, %s11
    %p156 = scmp.lt.s32.totalorder %s11, 3
    %p157 = pnand %p155, %p156
    %p158 = pneg %p157
    // Predicated region
    $region9: #{conv_block_forward.1} parent=5 // pred_check
      _
    $region10: #{conv_block_forward.1} parent=5 // pred_check_branch
      %160 = sbr.rel (%p157) target = $region12
    $region11: #{conv_block_forward.1} parent=5 // pred_region
      %s161 = ssub.s32 %s11, 1
      // Predicated region
      $region13: #{conv_block_forward.1} parent=11 // pred_check
        %p162 = pneg %p58
      $region14: #{conv_block_forward.1} parent=11 // pred_check_branch
        %164 = sbr.rel (%p162) target = $region16
      $region15: #{conv_block_forward.1} parent=11 // pred_region
        _
      $region16: #{conv_block_forward.1} parent=11 // pred_fallthru
        _
      // Predicated region
      $region17: #{conv_block_forward.1} parent=11 // pred_check
        %p165 = pneg %p79
      $region18: #{conv_block_forward.1} parent=11 // pred_check_branch
        %167 = sbr.rel (%p165) target = $region20
      $region19: #{conv_block_forward.1} parent=11 // pred_region
        _
      $region20: #{conv_block_forward.1} parent=11 // pred_fallthru
        _
      // Predicated region
      $region21: #{conv_block_forward.1} parent=11 // pred_check
        %p168 = pneg %p100
      $region22: #{conv_block_forward.1} parent=11 // pred_check_branch
        %170 = sbr.rel (%p168) target = $region24
      $region23: #{conv_block_forward.1} parent=11 // pred_region
        _
      $region24: #{conv_block_forward.1} parent=11 // pred_fallthru
        _
      // Predicated region
      $region25: #{conv_block_forward.1} parent=11 // pred_check
        %p171 = pneg %p121
      $region26: #{conv_block_forward.1} parent=11 // pred_check_branch
        %173 = sbr.rel (%p171) target = $region28
      $region27: #{conv_block_forward.1} parent=11 // pred_region
        _
      $region28: #{conv_block_forward.1} parent=11 // pred_fallthru
        _
    $region12: #{conv_block_forward.1} parent=5 // pred_fallthru
      _
    %p174 = scmp.lt.s32.totalorder %s11, 2
    // Predicated region
    $region29: #{conv_block_forward.1} parent=5 // pred_check
      %p175 = pneg %p174
    $region30: #{conv_block_forward.1} parent=5 // pred_check_branch
      %177 = sbr.rel (%p175) target = $region32
    $region31: #{conv_block_forward.1} parent=5 // pred_region
      // Predicated region
      $region33: #{conv_block_forward.1} parent=31 // pred_check
        %p178 = pneg %p31
      $region34: #{conv_block_forward.1} parent=31 // pred_check_branch
        %180 = sbr.rel (%p178) target = $region36
      $region35: #{conv_block_forward.1} parent=31 // pred_region
        %p181 = scmp.lt.s32.totalorder %s11, 1
        %s182 = scalar_select %p181, %s11, 1
        %s183 = smul.addr %s182, 2
        %s184 = smul.addr %s183, 8
        %s185 = scalar_lea.vmem %s0, %s184
      $region36: #{conv_block_forward.1} parent=31 // pred_fallthru
        _
    $region32: #{conv_block_forward.1} parent=5 // pred_fallthru
      _
    %p186 = scmp.le.s32.totalorder 1, %s11
    %p187 = scmp.lt.s32.totalorder %s11, 3
    %p188 = pnand %p186, %p187
    %p189 = pneg %p188
    // Predicated region
    $region37: #{conv_block_forward.1} parent=5 // pred_check
      _
    $region38: #{conv_block_forward.1} parent=5 // pred_check_branch
      %191 = sbr.rel (%p188) target = $region40
    $region39: #{conv_block_forward.1} parent=5 // pred_region
      %s192 = ssub.s32 %s11, 1
      %p193 = scmp.lt.s32.totalorder %s16, 1
      %s194 = scalar_select %p193, %s16, 1
      %s195 = smul.addr %s194, 2
      %s196 = smul.addr %s195, 8
      %s197 = scalar_lea.vmem %s0, %s196
      %p198 = pneg %p37
      %p199 = pneg %p34
      %p200 = pneg %p58
      %p201 = pneg %p55
      %p202 = pneg %p79
      %p203 = pneg %p76
      %p204 = pneg %p100
      %p205 = pneg %p97
      %p206 = pneg %p121
      %p207 = pneg %p118
      %p208 = pneg %p147
      %p209 = pneg %p144
      %p210 = scmp.lt.s32.totalorder %s16, 1
      %s211 = scalar_select %p210, %s16, 1
      %s212 = smul.addr %s211, 2
      %s213 = smul.addr %s212, 8
      %s214 = scalar_lea.vmem %s5, %s213
      %p215 = scmp.lt.s32.totalorder %s16, 1
      %s216 = scalar_select %p215, %s16, 1
      %s217 = smul.addr %s216, 2
      %s218 = smul.addr %s217, 8
      %s219 = scalar_lea.vmem %s0, %s218
      %p220 = scmp.lt.s32.totalorder %s16, 1
      %s221 = scalar_select %p220, %s16, 1
      %s222 = smul.addr %s221, 2
      %s223 = smul.addr %s222, 8
      %s224 = scalar_lea.vmem %s5, %s223
      %v226 = vld [vmem:[%s219] sm:$0xff]
      %v227 = vld [vmem:[%s219 + $0x8] sm:$0xff]
      %v228 = vpack.c.bf16 %v227, %v226
      %230 = vrot.lane.b32.xlu0 %v228, 64
      %v231 = vpop.permute.xlu0 %230
      %vm233 = vcmask 1048064
      %234 = vst.msk [vmem:[#allocation2] sm:$0xff] %vm233, %v231
      %vm235 = vcmask 516096
      %vm236 = vsmask.f32 256
      %vm237 = vmand %vm235, %vm236
      %v238 = vld [vmem:[#allocation2] sm:$0x1]
      %v239 = vsel %vm237, 0, %v238
      %240 = vst [vmem:[#allocation2] sm:$0x1] %v239
      %v242 = vshrl.u32 %v228, 16
      %v244 = vrot.slane %v242, 7
      %v245 = vshll.u32 %v228, 16
      %v247 = vor.u32 %v244, %v245
      %vm249 = vcmask 523264
      %vm250 = vsmask.f32 7938
      %vm251 = vmand %vm249, %vm250
      %v252 = vld [vmem:[#allocation2] sm:$0xff]
      %v253 = vsel %vm251, %v247, %v252
      %254 = vst [vmem:[#allocation2] sm:$0xff] %v253
      %v255 = vrot.slane %v245, 1
      %v256 = vor.u32 %v242, %v255
      %vm258 = vsmask.f32 7424
      %vm259 = vmand %vm249, %vm258
      %v260 = vld [vmem:[#allocation2 + $0x8] sm:$0xff]
      %v261 = vsel %vm259, %v256, %v260
      %262 = vst [vmem:[#allocation2 + $0x8] sm:$0xff] %v261
      %vm263 = vcmask 523271
      %vm264 = vsmask.f32 7966
      %vm265 = vmand %vm263, %vm264
      %v266 = vld [vmem:[#allocation2 + $0x8] sm:$0x80]
      %v267 = vsel %vm265, 0, %v266
      %268 = vst [vmem:[#allocation2 + $0x8] sm:$0x80] %v267
      %v269 = vld [vmem:[#allocation2] sm:$0xff]
      %v270 = vld [vmem:[#allocation2 + $0x8] sm:$0xff]
      %v271 = vld [vmem:[%s1] sm:$0xf]
      %v272 = vld [vmem:[%s1 + $0x4] sm:$0xf]
      %v273 = vld [vmem:[%s1 + $0x8] sm:$0xf]
      %v274 = vld [vmem:[%s1 + $0xc] sm:$0xf]
      %v275 = vld [vmem:[%s1 + $0x10] sm:$0xf]
      %v276 = vld [vmem:[%s1 + $0x14] sm:$0xf]
      %v277 = vld [vmem:[%s1 + $0x18] sm:$0xf]
      %v278 = vld [vmem:[%s1 + $0x1c] sm:$0xf]
      %v279 = vld [vmem:[%s1 + $0x20] sm:$0xf]
      %v280 = vld [vmem:[%s1 + $0x24] sm:$0xf]
      %v281 = vld [vmem:[%s1 + $0x28] sm:$0xf]
      %v282 = vld [vmem:[%s1 + $0x2c] sm:$0xf]
      %v283 = vld [vmem:[%s1 + $0x30] sm:$0xf]
      %v284 = vld [vmem:[%s1 + $0x34] sm:$0xf]
      %v285 = vld [vmem:[%s1 + $0x38] sm:$0xf]
      %v286 = vld [vmem:[%s1 + $0x3c] sm:$0xf]
      %v287 = vld [vmem:[%s1 + $0x40] sm:$0xf]
      %v288 = vld [vmem:[%s1 + $0x44] sm:$0xf]
      %v289 = vld [vmem:[%s1 + $0x48] sm:$0xf]
      %v290 = vld [vmem:[%s1 + $0x4c] sm:$0xf]
      %v291 = vld [vmem:[%s1 + $0x50] sm:$0xf]
      %v292 = vld [vmem:[%s1 + $0x54] sm:$0xf]
      %v293 = vld [vmem:[%s1 + $0x58] sm:$0xf]
      %v294 = vld [vmem:[%s1 + $0x5c] sm:$0xf]
      %v295 = vld [vmem:[%s2] sm:$0x1]
      %v297 = vlaneseq
      %v298 = vshrl.u32 %v297, 7
      %v299 = vsub.s32 0, %v298
      %v300 = vrot.slane %v295, %v299
      %v326 = vunpack.c.l.b16 %v271
      %v327 = vunpack.c.l.b16 %v272
      %v328 = vunpack.c.l.b16 %v273
      %v329 = vunpack.c.l.b16 %v274
      %v330 = vunpack.c.l.b16 %v275
      %v331 = vunpack.c.l.b16 %v276
      %v332 = vunpack.c.l.b16 %v277
      %v333 = vunpack.c.l.b16 %v278
      %v334 = vunpack.c.l.b16 %v279
      %v335 = vunpack.c.l.b16 %v280
      %v336 = vunpack.c.l.b16 %v281
      %v337 = vunpack.c.l.b16 %v282
      %v338 = vunpack.c.l.b16 %v283
      %v339 = vunpack.c.l.b16 %v284
      %v340 = vunpack.c.l.b16 %v285
      %v341 = vunpack.c.l.b16 %v286
      %v342 = vunpack.c.l.b16 %v287
      %v343 = vunpack.c.l.b16 %v288
      %v344 = vunpack.c.l.b16 %v289
      %v345 = vunpack.c.l.b16 %v290
      %v346 = vunpack.c.l.b16 %v291
      %v347 = vunpack.c.l.b16 %v292
      %v348 = vunpack.c.l.b16 %v293
      %v349 = vunpack.c.l.b16 %v294
      %v350 = vpack.c.b16 %v327, %v326
      %v351 = vpack.c.b16 %v329, %v328
      %v352 = vpack.c.b16 %v331, %v330
      %v353 = vpack.c.b16 %v333, %v332
      %v354 = vpack.c.b16 %v335, %v334
      %v355 = vpack.c.b16 %v337, %v336
      %v356 = vpack.c.b16 %v339, %v338
      %v357 = vpack.c.b16 %v341, %v340
      %v358 = vpack.c.b16 %v343, %v342
      %v359 = vpack.c.b16 %v345, %v344
      %v360 = vpack.c.b16 %v347, %v346
      %v361 = vpack.c.b16 %v349, %v348
      %vm374 = vcmask 523264
      %v376 = vsel %vm374, %v270, 0
      %378 = vmatprep.subr.bf16.mxu0 0
      %379 = vmatpush1.bf16.msra.mxu0 %v350
      %380 = vmatprep.subr.bf16.mxu0 0
      %381 = vmatpush1.bf16.msra.mxu0 %v351
      %382 = vmatprep.subr.bf16.mxu0 0
      %383 = vmatpush1.bf16.msra.mxu0 %v352
      %384 = vmatprep.subr.bf16.mxu0 0
      %385 = vmatpush1.bf16.msra.mxu0 %v353
      %386 = vmatprep.subr.bf16.mxu0 0
      %387 = vmatpush1.bf16.msra.mxu0 %v354
      %388 = vmatprep.subr.bf16.mxu0 0
      %389 = vmatpush1.bf16.msra.mxu0 %v355
      %390 = vmatprep.subr.bf16.mxu0 0
      %391 = vmatpush1.bf16.msra.mxu0 %v356
      %392 = vmatprep.subr.bf16.mxu0 0
      %393 = vmatpush1.bf16.msra.mxu0 %v357
      %394 = vmatprep.subr.bf16.mxu0 0
      %395 = vmatpush1.bf16.msra.mxu0 %v358
      %396 = vmatprep.subr.bf16.mxu0 0
      %397 = vmatpush1.bf16.msra.mxu0 %v359
      %398 = vmatprep.subr.bf16.mxu0 0
      %399 = vmatpush1.bf16.msra.mxu0 %v360
      %400 = vmatprep.subr.bf16.mxu0 0
      %401 = vmatpush1.bf16.msra.mxu0 %v361
      %402 = vmatprep.subr.bf16.mxu0 0
      %403 = vmatpush1.bf16.msra.mxu0 0
      %404 = vmatprep.subr.bf16.mxu0 0
      %405 = vmatpush1.bf16.msra.mxu0 0
      %406 = vmatprep.subr.bf16.mxu0 0
      %407 = vmatpush1.bf16.msra.mxu0 0
      %408 = vmatprep.subr.bf16.mxu0 0
      %409 = vmatpush1.bf16.msra.mxu0 0
      %410 = vmatprep.mubr.bf16.mxu0 %v376
      %411 = vmatmul.mubr.bf16.gmra.mrb[0].mxu0 %v269
      %v412 = vpop.f32.mrb[0].mxu0
      %v413 = vadd.f32 %v300, %v412
      %v414 = vpop.f32.mrb[0].mxu0
      %v415 = vpop.f32.mrb[0].mxu0
      %v416 = vadd.f32 %v300, %v415
      %v417 = vpop.f32.mrb[0].mxu0
      %418 = vdwg.mxu0
      %v419 = vmax.f32 %v413, 0.0
      %v420 = vmax.f32 %v416, 0.0
      %v421 = vpack.c.bf16 %v420, %v419
      %422 = vst [vmem:[#allocation3 + $0x8] sm:$0xff] %v421
      %vm423 = vcmask 1040384
      %vm424 = vmand %vm423, %vm236
      %v425 = vld [vmem:[#allocation3] sm:$0x1]
      %v426 = vsel %vm424, 0, %v425
      %427 = vst [vmem:[#allocation3] sm:$0x1] %v426
      %v429 = vshrl.u32 %v421, 16
      %v431 = vrot.slane %v429, 7
      %v432 = vshll.u32 %v421, 16
      %v434 = vor.u32 %v431, %v432
      %vm436 = vcmask 1047552
      %vm437 = vmand %vm436, %vm250
      %v438 = vld [vmem:[#allocation3] sm:$0xff]
      %v439 = vsel %vm437, %v434, %v438
      %440 = vst [vmem:[#allocation3] sm:$0xff] %v439
      %v441 = vrot.slane %v432, 1
      %v442 = vor.u32 %v429, %v441
      %vm444 = vmand %vm436, %vm258
      %v445 = vld [vmem:[#allocation3 + $0x10] sm:$0xff]
      %v446 = vsel %vm444, %v442, %v445
      %447 = vst [vmem:[#allocation3 + $0x10] sm:$0xff] %v446
      %vm448 = vcmask 1047559
      %vm449 = vmand %vm448, %vm264
      %v450 = vld [vmem:[#allocation3 + $0x10] sm:$0x80]
      %v451 = vsel %vm449, 0, %v450
      %452 = vst [vmem:[#allocation3 + $0x10] sm:$0x80] %v451
      %v453 = vld [vmem:[#allocation3] sm:$0xff]
      %v454 = vld [vmem:[#allocation3 + $0x8] sm:$0xff]
      %v455 = vld [vmem:[#allocation3 + $0x10] sm:$0xff]
      %v456 = vld [vmem:[%s3] sm:$0xf]
      %v457 = vld [vmem:[%s3 + $0x4] sm:$0xf]
      %v458 = vld [vmem:[%s3 + $0x8] sm:$0xf]
      %v459 = vld [vmem:[%s3 + $0xc] sm:$0xf]
      %v460 = vld [vmem:[%s3 + $0x10] sm:$0xf]
      %v461 = vld [vmem:[%s3 + $0x14] sm:$0xf]
      %v462 = vld [vmem:[%s3 + $0x18] sm:$0xf]
      %v463 = vld [vmem:[%s3 + $0x1c] sm:$0xf]
      %v464 = vld [vmem:[%s3 + $0x20] sm:$0xf]
      %v465 = vld [vmem:[%s3 + $0x24] sm:$0xf]
      %v466 = vld [vmem:[%s3 + $0x28] sm:$0xf]
      %v467 = vld [vmem:[%s3 + $0x2c] sm:$0xf]
      %v468 = vld [vmem:[%s3 + $0x30] sm:$0xf]
      %v469 = vld [vmem:[%s3 + $0x34] sm:$0xf]
      %v470 = vld [vmem:[%s3 + $0x38] sm:$0xf]
      %v471 = vld [vmem:[%s3 + $0x3c] sm:$0xf]
      %v472 = vld [vmem:[%s3 + $0x40] sm:$0xf]
      %v473 = vld [vmem:[%s3 + $0x44] sm:$0xf]
      %v474 = vld [vmem:[%s3 + $0x48] sm:$0xf]
      %v475 = vld [vmem:[%s3 + $0x4c] sm:$0xf]
      %v476 = vld [vmem:[%s3 + $0x50] sm:$0xf]
      %v477 = vld [vmem:[%s3 + $0x54] sm:$0xf]
      %v478 = vld [vmem:[%s3 + $0x58] sm:$0xf]
      %v479 = vld [vmem:[%s3 + $0x5c] sm:$0xf]
      %v480 = vld [vmem:[%s3 + $0x60] sm:$0xf]
      %v481 = vld [vmem:[%s3 + $0x64] sm:$0xf]
      %v482 = vld [vmem:[%s3 + $0x68] sm:$0xf]
      %v483 = vld [vmem:[%s3 + $0x6c] sm:$0xf]
      %v484 = vld [vmem:[%s3 + $0x70] sm:$0xf]
      %v485 = vld [vmem:[%s3 + $0x74] sm:$0xf]
      %v486 = vld [vmem:[%s3 + $0x78] sm:$0xf]
      %v487 = vld [vmem:[%s3 + $0x7c] sm:$0xf]
      %v488 = vld [vmem:[%s3 + $0x80] sm:$0xf]
      %v489 = vld [vmem:[%s3 + $0x84] sm:$0xf]
      %v490 = vld [vmem:[%s3 + $0x88] sm:$0xf]
      %v491 = vld [vmem:[%s3 + $0x8c] sm:$0xf]
      %v492 = vld [vmem:[%s3 + $0x90] sm:$0xf]
      %v493 = vld [vmem:[%s3 + $0x94] sm:$0xf]
      %v494 = vld [vmem:[%s3 + $0x98] sm:$0xf]
      %v495 = vld [vmem:[%s3 + $0x9c] sm:$0xf]
      %v496 = vld [vmem:[%s3 + $0xa0] sm:$0xf]
      %v497 = vld [vmem:[%s3 + $0xa4] sm:$0xf]
      %v498 = vld [vmem:[%s3 + $0xa8] sm:$0xf]
      %v499 = vld [vmem:[%s3 + $0xac] sm:$0xf]
      %v500 = vld [vmem:[%s3 + $0xb0] sm:$0xf]
      %v501 = vld [vmem:[%s3 + $0xb4] sm:$0xf]
      %v502 = vld [vmem:[%s3 + $0xb8] sm:$0xf]
      %v503 = vld [vmem:[%s3 + $0xbc] sm:$0xf]
      %v504 = vld [vmem:[%s4] sm:$0x1]
      %v506 = vlaneseq
      %v507 = vshrl.u32 %v506, 7
      %v508 = vsub.s32 0, %v507
      %v509 = vrot.slane %v504, %v508
      %v559 = vunpack.c.l.b16 %v456
      %v560 = vunpack.c.l.b16 %v457
      %v561 = vunpack.c.l.b16 %v458
      %v562 = vunpack.c.l.b16 %v459
      %v563 = vunpack.c.l.b16 %v460
      %v564 = vunpack.c.l.b16 %v461
      %v565 = vunpack.c.l.b16 %v462
      %v566 = vunpack.c.l.b16 %v463
      %v567 = vunpack.c.l.b16 %v464
      %v568 = vunpack.c.l.b16 %v465
      %v569 = vunpack.c.l.b16 %v466
      %v570 = vunpack.c.l.b16 %v467
      %v571 = vunpack.c.l.b16 %v468
      %v572 = vunpack.c.l.b16 %v469
      %v573 = vunpack.c.l.b16 %v470
      %v574 = vunpack.c.l.b16 %v471
      %v575 = vunpack.c.l.b16 %v472
      %v576 = vunpack.c.l.b16 %v473
      %v577 = vunpack.c.l.b16 %v474
      %v578 = vunpack.c.l.b16 %v475
      %v579 = vunpack.c.l.b16 %v476
      %v580 = vunpack.c.l.b16 %v477
      %v581 = vunpack.c.l.b16 %v478
      %v582 = vunpack.c.l.b16 %v479
      %v583 = vunpack.c.l.b16 %v480
      %v584 = vunpack.c.l.b16 %v481
      %v585 = vunpack.c.l.b16 %v482
      %v586 = vunpack.c.l.b16 %v483
      %v587 = vunpack.c.l.b16 %v484
      %v588 = vunpack.c.l.b16 %v485
      %v589 = vunpack.c.l.b16 %v486
      %v590 = vunpack.c.l.b16 %v487
      %v591 = vunpack.c.l.b16 %v488
      %v592 = vunpack.c.l.b16 %v489
      %v593 = vunpack.c.l.b16 %v490
      %v594 = vunpack.c.l.b16 %v491
      %v595 = vunpack.c.l.b16 %v492
      %v596 = vunpack.c.l.b16 %v493
      %v597 = vunpack.c.l.b16 %v494
      %v598 = vunpack.c.l.b16 %v495
      %v599 = vunpack.c.l.b16 %v496
      %v600 = vunpack.c.l.b16 %v497
      %v601 = vunpack.c.l.b16 %v498
      %v602 = vunpack.c.l.b16 %v499
      %v603 = vunpack.c.l.b16 %v500
      %v604 = vunpack.c.l.b16 %v501
      %v605 = vunpack.c.l.b16 %v502
      %v606 = vunpack.c.l.b16 %v503
      %v607 = vpack.c.b16 %v560, %v559
      %v608 = vpack.c.b16 %v562, %v561
      %v609 = vpack.c.b16 %v564, %v563
      %v610 = vpack.c.b16 %v566, %v565
      %v611 = vpack.c.b16 %v568, %v567
      %v612 = vpack.c.b16 %v570, %v569
      %v613 = vpack.c.b16 %v572, %v571
      %v614 = vpack.c.b16 %v574, %v573
      %v615 = vpack.c.b16 %v576, %v575
      %v616 = vpack.c.b16 %v578, %v577
      %v617 = vpack.c.b16 %v580, %v579
      %v618 = vpack.c.b16 %v582, %v581
      %v619 = vpack.c.b16 %v584, %v583
      %v620 = vpack.c.b16 %v586, %v585
      %v621 = vpack.c.b16 %v588, %v587
      %v622 = vpack.c.b16 %v590, %v589
      %v623 = vpack.c.b16 %v592, %v591
      %v624 = vpack.c.b16 %v594, %v593
      %v625 = vpack.c.b16 %v596, %v595
      %v626 = vpack.c.b16 %v598, %v597
      %v627 = vpack.c.b16 %v600, %v599
      %v628 = vpack.c.b16 %v602, %v601
      %v629 = vpack.c.b16 %v604, %v603
      %v630 = vpack.c.b16 %v606, %v605
      %655 = vmatprep.subr.bf16.mxu0 0
      %656 = vmatpush1.bf16.msra.mxu0 %v607
      %657 = vmatprep.subr.bf16.mxu0 0
      %658 = vmatpush1.bf16.msra.mxu0 %v608
      %659 = vmatprep.subr.bf16.mxu0 0
      %660 = vmatpush1.bf16.msra.mxu0 %v609
      %661 = vmatprep.subr.bf16.mxu0 0
      %662 = vmatpush1.bf16.msra.mxu0 %v610
      %663 = vmatprep.subr.bf16.mxu0 0
      %664 = vmatpush1.bf16.msra.mxu0 %v611
      %665 = vmatprep.subr.bf16.mxu0 0
      %666 = vmatpush1.bf16.msra.mxu0 %v612
      %667 = vmatprep.subr.bf16.mxu0 0
      %668 = vmatpush1.bf16.msra.mxu0 %v613
      %669 = vmatprep.subr.bf16.mxu0 0
      %670 = vmatpush1.bf16.msra.mxu0 %v614
      %671 = vmatprep.subr.bf16.mxu0 0
      %672 = vmatpush1.bf16.msra.mxu0 %v615
      %673 = vmatprep.subr.bf16.mxu0 0
      %674 = vmatpush1.bf16.msra.mxu0 %v616
      %675 = vmatprep.subr.bf16.mxu0 0
      %676 = vmatpush1.bf16.msra.mxu0 %v617
      %677 = vmatprep.subr.bf16.mxu0 0
      %678 = vmatpush1.bf16.msra.mxu0 %v618
      %679 = vmatprep.subr.bf16.mxu0 0
      %680 = vmatpush1.bf16.msra.mxu0 %v619
      %681 = vmatprep.subr.bf16.mxu0 0
      %682 = vmatpush1.bf16.msra.mxu0 %v620
      %683 = vmatprep.subr.bf16.mxu0 0
      %684 = vmatpush1.bf16.msra.mxu0 %v621
      %685 = vmatprep.subr.bf16.mxu0 0
      %686 = vmatpush1.bf16.msra.mxu0 %v622
      %687 = vmatprep.mubr.bf16.mxu0 %v454
      %688 = vmatmul.mubr.bf16.gmra.mrb[0].mxu0 %v453
      %v689 = vpop.f32.mrb[0].mxu0
      %v690 = vadd.f32 %v509, %v689
      %v691 = vpop.f32.mrb[0].mxu0
      %v692 = vpop.f32.mrb[0].mxu0
      %v693 = vadd.f32 %v509, %v692
      %v694 = vpop.f32.mrb[0].mxu0
      %695 = vdwg.mxu0
      %696 = vmatprep.subr.bf16.mxu0 0
      %697 = vmatpush1.bf16.msra.mxu0 %v623
      %698 = vmatprep.subr.bf16.mxu0 0
      %699 = vmatpush1.bf16.msra.mxu0 %v624
      %700 = vmatprep.subr.bf16.mxu0 0
      %701 = vmatpush1.bf16.msra.mxu0 %v625
      %702 = vmatprep.subr.bf16.mxu0 0
      %703 = vmatpush1.bf16.msra.mxu0 %v626
      %704 = vmatprep.subr.bf16.mxu0 0
      %705 = vmatpush1.bf16.msra.mxu0 %v627
      %706 = vmatprep.subr.bf16.mxu0 0
      %707 = vmatpush1.bf16.msra.mxu0 %v628
      %708 = vmatprep.subr.bf16.mxu0 0
      %709 = vmatpush1.bf16.msra.mxu0 %v629
      %710 = vmatprep.subr.bf16.mxu0 0
      %711 = vmatpush1.bf16.msra.mxu0 %v630
      %712 = vmatprep.subr.bf16.mxu0 0
      %713 = vmatpush1.bf16.msra.mxu0 0
      %714 = vmatprep.subr.bf16.mxu0 0
      %715 = vmatpush1.bf16.msra.mxu0 0
      %716 = vmatprep.subr.bf16.mxu0 0
      %717 = vmatpush1.bf16.msra.mxu0 0
      %718 = vmatprep.subr.bf16.mxu0 0
      %719 = vmatpush1.bf16.msra.mxu0 0
      %720 = vmatprep.subr.bf16.mxu0 0
      %721 = vmatpush1.bf16.msra.mxu0 0
      %722 = vmatprep.subr.bf16.mxu0 0
      %723 = vmatpush1.bf16.msra.mxu0 0
      %724 = vmatprep.subr.bf16.mxu0 0
      %725 = vmatpush1.bf16.msra.mxu0 0
      %726 = vmatprep.subr.bf16.mxu0 0
      %727 = vmatpush1.bf16.msra.mxu0 0
      %728 = vmatprep.mubr.bf16.mxu0 0
      %729 = vmatmul.mubr.bf16.gmra.mrb[0].mxu0 %v455
      %v730 = vpop.f32.mrb[0].mxu0
      %v731 = vadd.f32 %v690, %v730
      %v732 = vpop.f32.mrb[0].mxu0
      %v733 = vpop.f32.mrb[0].mxu0
      %v734 = vadd.f32 %v693, %v733
      %v735 = vpop.f32.mrb[0].mxu0
      %736 = vdwg.mxu0
      %v737 = vmax.f32 %v731, 0.0
      %v738 = vmax.f32 %v734, 0.0
      %739 = vst [vmem:[%s224] sm:$0xff] %v737
      %740 = vst [vmem:[%s224 + $0x8] sm:$0xff] %v738
      %p741 = scmp.lt.s32.totalorder %s16, 1
      %s742 = scalar_select %p741, %s16, 1
      %s743 = smul.addr %s742, 2
      %s744 = smul.addr %s743, 8
      %s745 = scalar_lea.vmem %s5, %s744
      // Predicated region
      $region41: #{conv_block_forward.1} parent=39 // pred_check
        %p746 = pneg %p144
      $region42: #{conv_block_forward.1} parent=39 // pred_check_branch
        %748 = sbr.rel (%p746) target = $region44
      $region43: #{conv_block_forward.1} parent=39 // pred_region
        _
      $region44: #{conv_block_forward.1} parent=39 // pred_fallthru
        _
    $region40: #{conv_block_forward.1} parent=5 // pred_fallthru
      _
    %p749 = scmp.le.s32.totalorder 2, %s11
    // Predicated region
    $region45: #{conv_block_forward.1} parent=5 // pred_check
      %p750 = pneg %p749
    $region46: #{conv_block_forward.1} parent=5 // pred_check_branch
      %752 = sbr.rel (%p750) target = $region48
    $region47: #{conv_block_forward.1} parent=5 // pred_region
      %s753 = ssub.s32 %s11, 2
      // Predicated region
      $region49: #{conv_block_forward.1} parent=47 // pred_check
        %p754 = pneg %p150
      $region50: #{conv_block_forward.1} parent=47 // pred_check_branch
        %756 = sbr.rel (%p754) target = $region52
      $region51: #{conv_block_forward.1} parent=47 // pred_region
        %p757 = scmp.lt.s32.totalorder %s17, 1
        %s758 = scalar_select %p757, %s17, 1
        %s759 = smul.addr %s758, 2
        %s760 = smul.addr %s759, 8
        %s761 = scalar_lea.vmem %s5, %s760
      $region52: #{conv_block_forward.1} parent=47 // pred_fallthru
        _
    $region48: #{conv_block_forward.1} parent=5 // pred_fallthru
      _
  $region6: #{conv_block_forward.1} parent=0 // loop_footer
    %s15 = sadd.s32 1, %s11
  $region7: #{conv_block_forward.1} parent=0 // loop_footer_branch
    %10 = sbr.rel target = $region3
  $region8: #{conv_block_forward.1} parent=0 // loop_exit
    _

</llo_original>
